<compile_context>
chip_gen: v7x
topology: tpu7x:2x2x1
jax: 0.10.0
libtpu: 0.0.40
codegen_flags: <defaults>
</compile_context>

<pallas_src>
from functools import partial

import jax
import jax.numpy as jnp
from jax import lax
from jax.experimental import pallas as pl
from jax.experimental.pallas import tpu as pltpu


def make_cbr_kernel(M, eps):
    inv_m = 1.0 / float(M)

    def kernel(p_ref, w_ref, gb_ref, o_ref):
        # --- Conv2d as one implicit GEMM on the MXU (bf16 in, f32 accum) ----
        # w_ref: [Cout, K] bf16, p_ref: [K, M] bf16  ->  acc: [Cout, M] f32
        acc = jnp.dot(w_ref[...], p_ref[...], preferred_element_type=jnp.float32)

        # --- BatchNorm2d (training-mode batch stats), single pass -----------
        s = jnp.sum(acc, axis=1, keepdims=True)             # [Cout, 1]
        ss = jnp.sum(acc * acc, axis=1, keepdims=True)      # [Cout, 1]
        mean = s * inv_m
        # Guard E[x^2]-E[x]^2 cancellation (can go slightly negative).
        var = jnp.maximum(ss * inv_m - mean * mean, 0.0)    # biased variance (1/N)
        gamma = gb_ref[:, 0:1]                              # [Cout, 1]
        beta = gb_ref[:, 1:2]                               # [Cout, 1]
        scale = lax.rsqrt(var + eps) * gamma                # gamma / sqrt(var+eps)
        shift = beta - mean * scale                         # beta - mean*scale
        y = acc * scale + shift                             # single FMA pass

        # --- ReLU + lane-dense store (last dim = M = 512, unmasked vst) -----
        o_ref[...] = jnp.maximum(y, 0.0)

    return kernel


@partial(jax.jit, static_argnames=("padding", "eps"))
def conv2d_bn_relu(x_nchw, w_oihw, bias, gamma, beta, *, padding=1, eps=1e-5):
    """PyTorch-semantics conv2DBatchNormRelu forward (stride=1, dilation=1, with_bn=True)."""
    N, Cin, H, W = x_nchw.shape
    Cout, Cin_w, KH, KW = w_oihw.shape
    assert Cin == Cin_w
    Ho = H + 2 * padding - KH + 1
    Wo = W + 2 * padding - KW + 1
    M = N * Ho * Wo
    K = KH * KW * Cin

    # ---- wrapper-side layout plumbing (no FLOPs), built directly as [K, M] ----
    # Cast to bf16 EARLY so the pad/slice/concat plumbing moves half the bytes.
    x_cnhw = jnp.transpose(x_nchw, (1, 0, 2, 3)).astype(jnp.bfloat16)   # [Cin, N, H, W]
    x_pad = jnp.pad(x_cnhw, ((0, 0), (0, 0), (padding, padding), (padding, padding)))
    # Rows ordered (kh, kw, cin); lanes = M = N*Ho*Wo (row-major n, ho, wo).
    taps = [x_pad[:, :, kh:kh + Ho, kw:kw + Wo].reshape(Cin, M)
            for kh in range(KH) for kw in range(KW)]
    patches_km = jnp.concatenate(taps, axis=0)                          # [K, M] bf16

    # OIHW -> [Cout, (kh, kw, cin)] to match the patch row order.
    w_ck = jnp.transpose(w_oihw, (0, 2, 3, 1)).reshape(Cout, K).astype(jnp.bfloat16)

    # gamma/beta packed into one tiny input -> one DMA, one padded VMEM tile.
    gb = jnp.stack([gamma, beta], axis=1).astype(jnp.float32)           # [Cout, 2]

    # Conv bias cancels exactly under training-mode BN: (x+b) - mean(x+b) == x - mean(x),
    # so it is intentionally not passed to the kernel (dead compute removed).
    del bias

    kernel = make_cbr_kernel(M, eps)

    # No grid: whole-array blocks in VMEM, no grid-step prologue, no index_maps.
    # TODO(synk): at scaled shapes, (a) tile M on a grid axis (two-pass partial
    # sum/sum-sq BN stats then normalize; size M-tiles ~2x smaller for v7x's
    # 64 MiB VMEM and set vmem_limit_bytes), (b) grid over Cout with
    # dimension_semantics=("parallel",...) for v7x's 2 TCs (per-channel stats
    # stay exact), and (c) on v5e move im2col in-kernel (pl.ANY + async copies
    # of the raw input, 9 accumulated taps) to avoid the ~9x HBM read
    # amplification of a materialized patch slab.
    out_cm = pl.pallas_call(
        kernel,
        out_shape=jax.ShapeDtypeStruct((Cout, M), jnp.float32),
    )(patches_km, w_ck, gb)

    # [Cout, M] (row-major) == [Cout, N, Ho, Wo]  ->  PyTorch NCHW.  Free plumbing.
    return out_cm.reshape(Cout, N, Ho, Wo).transpose(1, 0, 2, 3)


def ref_forward(x, w, b, gamma, beta, *, padding=1, eps=1e-5, conv_dtype=jnp.float32):
    """Pure-JAX reference of the PyTorch module forward (training-mode BN)."""
    y = lax.conv_general_dilated(
        x.astype(conv_dtype), w.astype(conv_dtype),
        window_strides=(1, 1),
        padding=((padding, padding), (padding, padding)),
        dimension_numbers=('NCHW', 'OIHW', 'NCHW'),
        preferred_element_type=jnp.float32)
    y = y + b[None, :, None, None].astype(jnp.float32)
    mean = jnp.mean(y, axis=(0, 2, 3), keepdims=True)
    var = jnp.mean((y - mean) ** 2, axis=(0, 2, 3), keepdims=True)
    y = (y - mean) * lax.rsqrt(var + eps) * gamma[None, :, None, None] \
        + beta[None, :, None, None]
    return jnp.maximum(y, 0.0)


if __name__ == "__main__":
    # Small deterministic config: in_channels=4, n_filters=8, k=3, stride=1, pad=1.
    N, Cin, H, W = 2, 4, 16, 16
    Cout, KH, KW = 8, 3, 3

    key = jax.random.PRNGKey(0)
    kx, kw, kb = jax.random.split(key, 3)
    x = jax.random.normal(kx, (N, Cin, H, W), jnp.float32)
    w = 0.1 * jax.random.normal(kw, (Cout, Cin, KH, KW), jnp.float32)   # Conv2d.weight
    b = 0.1 * jax.random.normal(kb, (Cout,), jnp.float32)               # Conv2d.bias
    gamma = jnp.ones((Cout,), jnp.float32)                              # BatchNorm2d.weight
    beta = jnp.zeros((Cout,), jnp.float32)                              # BatchNorm2d.bias

    out = jax.block_until_ready(conv2d_bn_relu(x, w, b, gamma, beta, padding=1))
    assert out.shape == (N, Cout, H, W)

    # Tight check vs a reference that feeds the conv the same bf16-quantized
    # operands (isolates kernel-implementation error from bf16 input rounding).
    ref_bf16 = jax.block_until_ready(
        ref_forward(x, w, b, gamma, beta, padding=1, conv_dtype=jnp.bfloat16))
    err_tight = jnp.max(jnp.abs(out - ref_bf16))
    assert jnp.allclose(out, ref_bf16, atol=5e-3, rtol=5e-3), \
        f"max abs err vs bf16-conv reference: {err_tight}"

    # Sanity check vs the pure-f32 module forward; the only difference is the
    # intentional bf16 quantization of the conv operands (~1e-2 scale here).
    ref_f32 = jax.block_until_ready(
        ref_forward(x, w, b, gamma, beta, padding=1, conv_dtype=jnp.float32))
    err_f32 = jnp.max(jnp.abs(out - ref_f32))
    assert jnp.allclose(out, ref_f32, atol=5e-2, rtol=5e-2), \
        f"max abs err vs f32 reference: {err_f32}"

    print("KERNEL_OK")
</pallas_src>

<mosaic_0001>
module attributes {stable_mosaic.version = 11 : i64} {
  func.func @kernel(%arg0: memref<36x512xbf16, #tpu.memory_space<vmem>>, %arg1: memref<8x36xbf16, #tpu.memory_space<vmem>>, %arg2: memref<8x2xf32, #tpu.memory_space<vmem>>, %arg3: memref<8x512xf32, #tpu.memory_space<vmem>>) attributes {dimension_semantics = [], scalar_prefetch = 0 : i64, scratch_operands = 0 : i64, tpu.core_type = #tpu.core_type<tc>} {
    %c0 = arith.constant 0 : index
    %c0_0 = arith.constant 0 : index
    %0 = vector.load %arg1[%c0, %c0_0] : memref<8x36xbf16, #tpu.memory_space<vmem>>, vector<8x36xbf16>
    %c0_1 = arith.constant 0 : index
    %c0_2 = arith.constant 0 : index
    %1 = vector.load %arg0[%c0_1, %c0_2] : memref<36x512xbf16, #tpu.memory_space<vmem>>, vector<36x512xbf16>
    %cst = arith.constant dense<0.000000e+00> : vector<8x512xf32>
    %2 = tpu.matmul %0, %1, %cst {dimension_numbers = #tpu.dot_dimension_numbers<[1], [0], [0], [1], [0, 0, 1, 1], [], []>} : vector<8x36xbf16>, vector<36x512xbf16>, vector<8x512xf32> -> vector<8x512xf32>
    %cst_3 = arith.constant dense<0.000000e+00> : vector<8xf32>
    %3 = vector.multi_reduction <add>, %2, %cst_3 [1] : vector<8x512xf32> to vector<8xf32>
    %4 = vector.shape_cast %3 : vector<8xf32> to vector<8x1xf32>
    %5 = arith.mulf %2, %2 : vector<8x512xf32>
    %cst_4 = arith.constant dense<0.000000e+00> : vector<8xf32>
    %6 = vector.multi_reduction <add>, %5, %cst_4 [1] : vector<8x512xf32> to vector<8xf32>
    %7 = vector.shape_cast %6 : vector<8xf32> to vector<8x1xf32>
    %cst_5 = arith.constant 0.001953125 : f32
    %8 = vector.broadcast %cst_5 : f32 to vector<8x1xf32>
    %9 = arith.mulf %4, %8 : vector<8x1xf32>
    %cst_6 = arith.constant 0.001953125 : f32
    %10 = vector.broadcast %cst_6 : f32 to vector<8x1xf32>
    %11 = arith.mulf %7, %10 : vector<8x1xf32>
    %12 = arith.mulf %9, %9 : vector<8x1xf32>
    %13 = arith.subf %11, %12 : vector<8x1xf32>
    %cst_7 = arith.constant 0.000000e+00 : f32
    %14 = vector.broadcast %cst_7 : f32 to vector<8x1xf32>
    %15 = arith.maximumf %13, %14 : vector<8x1xf32>
    %c0_8 = arith.constant 0 : index
    %c0_9 = arith.constant 0 : index
    %16 = vector.load %arg2[%c0_8, %c0_9] : memref<8x2xf32, #tpu.memory_space<vmem>>, vector<8x1xf32>
    %c0_10 = arith.constant 0 : index
    %c1 = arith.constant 1 : index
    %17 = vector.load %arg2[%c0_10, %c1] : memref<8x2xf32, #tpu.memory_space<vmem>>, vector<8x1xf32>
    %cst_11 = arith.constant 9.99999974E-6 : f32
    %18 = vector.broadcast %cst_11 : f32 to vector<8x1xf32>
    %19 = arith.addf %15, %18 : vector<8x1xf32>
    %20 = math.rsqrt %19 : vector<8x1xf32>
    %21 = arith.mulf %20, %16 : vector<8x1xf32>
    %22 = arith.mulf %9, %21 : vector<8x1xf32>
    %23 = arith.subf %17, %22 : vector<8x1xf32>
    %24 = vector.broadcast %21 : vector<8x1xf32> to vector<8x512xf32>
    %25 = arith.mulf %2, %24 : vector<8x512xf32>
    %26 = vector.broadcast %23 : vector<8x1xf32> to vector<8x512xf32>
    %27 = arith.addf %25, %26 : vector<8x512xf32>
    %cst_12 = arith.constant 0.000000e+00 : f32
    %28 = vector.broadcast %cst_12 : f32 to vector<8x512xf32>
    %29 = arith.maximumf %27, %28 : vector<8x512xf32>
    %c0_13 = arith.constant 0 : index
    %c0_14 = arith.constant 0 : index
    %30 = vector.load %arg3[%c0_13, %c0_14] : memref<8x512xf32, #tpu.memory_space<vmem>>, vector<8x512xf32>
    tpu.vector_store %arg3[%c0_13, %c0_14], %29 {strides = array<i32>} : memref<8x512xf32, #tpu.memory_space<vmem>>, vector<8x512xf32>,
    return
  }
}

</mosaic_0001>

<llo_original>
// kernel: conv2d_bn_relu.1
$region0: #{conv2d_bn_relu.1}
  #allocation0 [shape = 'u32[]', space=smem, size = 0x4, offset = 0x4, fixed_abs, tag = 'smem constant byte address 0x4 - core index']
  #allocation1 [shape = 'u32[144,128]{1,0:T(1,128)}', space=vmem, size = 0x12000, scoped, tag = 'internal scratch']
  %s0 = inlined_call_operand.vmem [shape: bf16[36,512], index: 0, kind: input, shape index: {}]
  %s1 = inlined_call_operand.vmem [shape: bf16[8,36], index: 1, kind: input, shape index: {}]
  %s2 = inlined_call_operand.vmem [shape: f32[8,2], index: 2, kind: input, shape index: {}]
  %s3 = inlined_call_operand.vmem [shape: f32[8,512], index: 3, kind: output, shape index: {}]
  %s4 = sld [smem:[#allocation0]]
  $region22: #{conv2d_bn_relu.1} parent=0
    _
  %s6 = ssub.s32 1, %s4
  %s7 = scalar_select 0, %s6, %s4
  // Predicated region
  $region2: #{conv2d_bn_relu.1} parent=0 // pred_check
    _
  $region3: #{conv2d_bn_relu.1} parent=0 // pred_check_branch
    %9 = sbr.rel (0) target = $region5
  $region4: #{conv2d_bn_relu.1} parent=0 // pred_region
    _
  $region5: #{conv2d_bn_relu.1} parent=0 // pred_fallthru
    _
  // Predicated region
  $region6: #{conv2d_bn_relu.1} parent=0 // pred_check
    _
  $region7: #{conv2d_bn_relu.1} parent=0 // pred_check_branch
    %11 = sbr.rel (0) target = $region9
  $region8: #{conv2d_bn_relu.1} parent=0 // pred_region
    _
  $region9: #{conv2d_bn_relu.1} parent=0 // pred_fallthru
    _
  // Predicated region
  $region10: #{conv2d_bn_relu.1} parent=0 // pred_check
    _
  $region11: #{conv2d_bn_relu.1} parent=0 // pred_check_branch
    %13 = sbr.rel (0) target = $region13
  $region12: #{conv2d_bn_relu.1} parent=0 // pred_region
    _
  $region13: #{conv2d_bn_relu.1} parent=0 // pred_fallthru
    _
  %v15 = vld [vmem:[%s1] sm:$0xf]
  %v16 = vld [vmem:[%s0] sm:$0xff]
  %v17 = vld [vmem:[%s0 + $0x8] sm:$0xff]
  %v18 = vld [vmem:[%s0 + $0x10] sm:$0xff]
  %v19 = vld [vmem:[%s0 + $0x18] sm:$0xff]
  %v20 = vld [vmem:[%s0 + $0x20] sm:$0xff]
  %v21 = vld [vmem:[%s0 + $0x28] sm:$0xff]
  %v22 = vld [vmem:[%s0 + $0x30] sm:$0xff]
  %v23 = vld [vmem:[%s0 + $0x38] sm:$0xff]
  %v24 = vld [vmem:[%s0 + $0x40] sm:$0x33]
  %v25 = vld [vmem:[%s0 + $0x48] sm:$0x33]
  %v36 = vunpack.c.l.b16 %v16
  %v37 = vunpack.c.h.b16 %v16
  %v38 = vunpack.c.l.b16 %v17
  %v39 = vunpack.c.h.b16 %v17
  %v40 = vunpack.c.l.b16 %v18
  %v41 = vunpack.c.h.b16 %v18
  %v42 = vunpack.c.l.b16 %v19
  %v43 = vunpack.c.h.b16 %v19
  %v44 = vunpack.c.l.b16 %v20
  %v45 = vunpack.c.h.b16 %v20
  %v46 = vunpack.c.l.b16 %v21
  %v47 = vunpack.c.h.b16 %v21
  %v48 = vunpack.c.l.b16 %v22
  %v49 = vunpack.c.h.b16 %v22
  %v50 = vunpack.c.l.b16 %v23
  %v51 = vunpack.c.h.b16 %v23
  %v52 = vunpack.c.l.b16 %v24
  %v53 = vunpack.c.h.b16 %v24
  %v54 = vunpack.c.l.b16 %v25
  %v55 = vunpack.c.h.b16 %v25
  %v56 = vpack.c.b16 %v40, %v36
  %v57 = vpack.c.b16 %v41, %v37
  %v58 = vpack.c.b16 %v42, %v38
  %v59 = vpack.c.b16 %v43, %v39
  %v60 = vpack.c.b16 %v48, %v44
  %v61 = vpack.c.b16 %v49, %v45
  %v62 = vpack.c.b16 %v50, %v46
  %v63 = vpack.c.b16 %v51, %v47
  %v64 = vpack.c.b16 %v52, %v52
  %v65 = vpack.c.b16 %v53, %v53
  %v66 = vpack.c.b16 %v54, %v54
  %v67 = vpack.c.b16 %v55, %v55
  %vm76 = vcmask 293888
  %v78 = vsel %vm76, %v15, 0
  %vm80 = vcmask 1041408
  %v82 = vsel %vm80, %v64, 0
  %v85 = vsel %vm80, %v65, 0
  %v88 = vsel %vm80, %v66, 0
  %v91 = vsel %vm80, %v67, 0
  %93 = vmatprep.subr.bf16.mxu0 %v57
  %94 = vmatpush1.bf16.msra.mxu0 %v56
  %95 = vmatprep.subr.bf16.mxu0 %v61
  %96 = vmatpush1.bf16.msra.mxu0 %v60
  %97 = vmatprep.subr.bf16.mxu0 %v85
  %98 = vmatpush1.bf16.msra.mxu0 %v82
  %99 = vmatprep.subr.bf16.mxu0 0
  %100 = vmatpush1.bf16.msra.mxu0 0
  %101 = vmatprep.subr.bf16.mxu0 0
  %102 = vmatpush1.bf16.msra.mxu0 0
  %103 = vmatprep.subr.bf16.mxu0 0
  %104 = vmatpush1.bf16.msra.mxu0 0
  %105 = vmatprep.subr.bf16.mxu0 0
  %106 = vmatpush1.bf16.msra.mxu0 0
  %107 = vmatprep.subr.bf16.mxu0 0
  %108 = vmatpush1.bf16.msra.mxu0 0
  %109 = vmatprep.subr.bf16.mxu0 0
  %110 = vmatpush1.bf16.msra.mxu0 0
  %111 = vmatprep.subr.bf16.mxu0 0
  %112 = vmatpush1.bf16.msra.mxu0 0
  %113 = vmatprep.subr.bf16.mxu0 0
  %114 = vmatpush1.bf16.msra.mxu0 0
  %115 = vmatprep.subr.bf16.mxu0 0
  %116 = vmatpush1.bf16.msra.mxu0 0
  %117 = vmatprep.subr.bf16.mxu0 0
  %118 = vmatpush1.bf16.msra.mxu0 0
  %119 = vmatprep.subr.bf16.mxu0 0
  %120 = vmatpush1.bf16.msra.mxu0 0
  %121 = vmatprep.subr.bf16.mxu0 0
  %122 = vmatpush1.bf16.msra.mxu0 0
  %123 = vmatprep.subr.bf16.mxu0 0
  %124 = vmatpush1.bf16.msra.mxu0 0
  %125 = vmatprep.mubr.bf16.mxu0 0
  %126 = vmatmul.mubr.bf16.gmra.mrb[0].mxu0 %v78
  %v127 = vpop.f32.mrb[0].mxu0
  %v128 = vadd.f32 0.0, %v127
  %v129 = vpop.f32.mrb[0].mxu0
  %v130 = vadd.f32 0.0, %v129
  %v131 = vpop.f32.mrb[0].mxu0
  %v132 = vpop.f32.mrb[0].mxu0
  %133 = vdwg.mxu0
  %134 = vmatprep.subr.bf16.mxu0 %v59
  %135 = vmatpush1.bf16.msra.mxu0 %v58
  %136 = vmatprep.subr.bf16.mxu0 %v63
  %137 = vmatpush1.bf16.msra.mxu0 %v62
  %138 = vmatprep.subr.bf16.mxu0 %v91
  %139 = vmatpush1.bf16.msra.mxu0 %v88
  %140 = vmatprep.subr.bf16.mxu0 0
  %141 = vmatpush1.bf16.msra.mxu0 0
  %142 = vmatprep.subr.bf16.mxu0 0
  %143 = vmatpush1.bf16.msra.mxu0 0
  %144 = vmatprep.subr.bf16.mxu0 0
  %145 = vmatpush1.bf16.msra.mxu0 0
  %146 = vmatprep.subr.bf16.mxu0 0
  %147 = vmatpush1.bf16.msra.mxu0 0
  %148 = vmatprep.subr.bf16.mxu0 0
  %149 = vmatpush1.bf16.msra.mxu0 0
  %150 = vmatprep.subr.bf16.mxu0 0
  %151 = vmatpush1.bf16.msra.mxu0 0
  %152 = vmatprep.subr.bf16.mxu0 0
  %153 = vmatpush1.bf16.msra.mxu0 0
  %154 = vmatprep.subr.bf16.mxu0 0
  %155 = vmatpush1.bf16.msra.mxu0 0
  %156 = vmatprep.subr.bf16.mxu0 0
  %157 = vmatpush1.bf16.msra.mxu0 0
  %158 = vmatprep.subr.bf16.mxu0 0
  %159 = vmatpush1.bf16.msra.mxu0 0
  %160 = vmatprep.subr.bf16.mxu0 0
  %161 = vmatpush1.bf16.msra.mxu0 0
  %162 = vmatprep.subr.bf16.mxu0 0
  %163 = vmatpush1.bf16.msra.mxu0 0
  %164 = vmatprep.subr.bf16.mxu0 0
  %165 = vmatpush1.bf16.msra.mxu0 0
  %166 = vmatprep.mubr.bf16.mxu0 0
  %167 = vmatmul.mubr.bf16.gmra.mrb[0].mxu0 %v78
  %v168 = vpop.f32.mrb[0].mxu0
  %v169 = vadd.f32 0.0, %v168
  %v170 = vpop.f32.mrb[0].mxu0
  %v171 = vadd.f32 0.0, %v170
  %v172 = vpop.f32.mrb[0].mxu0
  %v173 = vpop.f32.mrb[0].mxu0
  %174 = vdwg.mxu0
  %v175 = vadd.f32 %v128, %v130
  %v176 = vadd.f32 %v175, %v169
  %v177 = vadd.f32 %v176, %v171
  %178 = vadd.xlane.f32.xlu0 %v177
  %v179 = vpop.xlane.xlu0 %178
  %v180 = vmul.f32 %v128, %v128
  %v181 = vmul.f32 %v130, %v130
  %v182 = vmul.f32 %v169, %v169
  %v183 = vmul.f32 %v171, %v171
  %v184 = vadd.f32 %v180, %v181
  %v185 = vadd.f32 %v184, %v182
  %v186 = vadd.f32 %v185, %v183
  %187 = vadd.xlane.f32.xlu0 %v186
  %v188 = vpop.xlane.xlu0 %187
  %v189 = vmul.f32 %v179, 0.001953125
  %v190 = vmul.f32 %v188, 0.001953125
  %v191 = vmul.f32 %v189, %v189
  %v192 = vsub.f32 %v190, %v191
  %v193 = vmax.f32 %v192, 0.0
  %v194 = vld [vmem:[%s2] sm:$0xff]
  %v195 = vadd.f32 %v193, 1e-05
  %v196 = vrsqrt.pop %v195
  %v197 = vmul.f32 %v196, %v194
  %v198 = vmul.f32 %v189, %v197
  %200 = vrot.lane.b32.xlu0 %v198, 1
  %v201 = vpop.permute.xlu0 %200
  %v203 = vsub.f32 %v194, %v201
  %205 = vset.pattern.permute.xlu0 0
  %206 = vperm.xlu0 %205, %v197
  %v207 = vpop.permute.xlu0 %206
  %v209 = vmul.f32 %v128, %v207
  %v210 = vmul.f32 %v130, %v207
  %v211 = vmul.f32 %v169, %v207
  %v212 = vmul.f32 %v171, %v207
  %214 = vset.pattern.permute.xlu0 1
  %215 = vperm.xlu0 %214, %v203
  %v216 = vpop.permute.xlu0 %215
  %v218 = vadd.f32 %v209, %v216
  %v219 = vadd.f32 %v210, %v216
  %v220 = vadd.f32 %v211, %v216
  %v221 = vadd.f32 %v212, %v216
  %v222 = vmax.f32 %v218, 0.0
  %v223 = vmax.f32 %v219, 0.0
  %v224 = vmax.f32 %v220, 0.0
  %v225 = vmax.f32 %v221, 0.0
  %226 = vst [vmem:[%s3] sm:$0xff] %v222
  %227 = vst [vmem:[%s3 + $0x8] sm:$0xff] %v223
  %228 = vst [vmem:[%s3 + $0x10] sm:$0xff] %v224
  %229 = vst [vmem:[%s3 + $0x18] sm:$0xff] %v225
  // Predicated region
  $region14: #{conv2d_bn_relu.1} parent=0 // pred_check
    _
  $region15: #{conv2d_bn_relu.1} parent=0 // pred_check_branch
    %231 = sbr.rel (0) target = $region17
  $region16: #{conv2d_bn_relu.1} parent=0 // pred_region
    _
  $region17: #{conv2d_bn_relu.1} parent=0 // pred_fallthru
    _
  // Predicated region
  $region18: #{conv2d_bn_relu.1} parent=0 // pred_check
    _
  $region19: #{conv2d_bn_relu.1} parent=0 // pred_check_branch
    %233 = sbr.rel (0) target = $region21
  $region20: #{conv2d_bn_relu.1} parent=0 // pred_region
    _
  $region21: #{conv2d_bn_relu.1} parent=0 // pred_fallthru
    _

</llo_original>
